<compile_context>
chip_gen: v7x
topology: tpu7x:2x2x1
jax: 0.10.0
libtpu: 0.0.40
codegen_flags: <defaults>
</compile_context>

<pallas_src>
import jax
import jax.numpy as jnp
from jax.experimental import pallas as pl
from jax.experimental.pallas import tpu as pltpu

# Problem sizes (small, consistent with the module: 1-channel content latent).
N, C, H, W = 2, 1, 16, 16
TOTAL = N * C * H * W
LANES = 128
assert TOTAL % LANES == 0
ROWS = TOTAL // LANES          # 4 -> (4, 128) lane-dense, sublane-filled tile


# ----------------------------------------------------------------------------
# Kernel (shared by forward & reverse; direction is folded into the constants)
# ----------------------------------------------------------------------------
def _flowstep_kernel(consts_ref, ldj_in_ref, z_ref, z_out_ref, ldj_out_ref):
    # consts = [a, b, d]  (SMEM scalars)
    #   z_out = z * a + b         (ActNorm + inv-1x1-conv, fused & pre-folded)
    #   ldj_out = ldj_in + d      (d = +/- H*W*(sum(logs) + log|det W|))
    a = consts_ref[0]
    b = consts_ref[1]
    d = consts_ref[2]
    z_out_ref[...] = z_ref[...] * a + b
    # TODO(synk): affine coupling (2 hidden conv layers, 64 ch) degenerates to
    # the identity for z_channels=1 with affine_split=0.5 (empty second half),
    # so it contributes nothing here.
    for n in range(N):                      # N=2 scalar SMEM stores, static
        ldj_out_ref[n] = ldj_in_ref[n] + d


# ----------------------------------------------------------------------------
# Wrapper (scalar folding / reshapes = glue; hot path is in the kernel)
# ----------------------------------------------------------------------------
_SMEM_SPEC = pl.BlockSpec(memory_space=pltpu.MemorySpace.SMEM)
_VMEM_SPEC = pl.BlockSpec(memory_space=pltpu.MemorySpace.VMEM)


def content_flow_apply(z, ldj, params, reverse=False):
    """Mirrors ContentFlow.forward(z, ldj, reverse)."""
    assert z.shape == (N, C, H, W)
    logs = params["logs"].astype(jnp.float32)   # (C,)   ActNorm log-scale
    bias = params["bias"].astype(jnp.float32)   # (C,)   ActNorm bias
    wmat = params["w"].astype(jnp.float32)      # (C, C) invertible 1x1 conv

    scale = jnp.exp(logs[0])
    w = wmat[0, 0]
    if C == 1:
        logabsdet = jnp.log(jnp.abs(w))          # avoid slogdet custom-call
    else:
        _, logabsdet = jnp.linalg.slogdet(wmat)
    dldj = (jnp.sum(logs) + logabsdet) * jnp.float32(H * W)

    sw = scale * w
    if not reverse:
        a, b, d = sw, bias[0] * sw, dldj
    else:
        a, b, d = 1.0 / sw, -bias[0], -dldj
    consts = jnp.stack([a, b, d]).astype(jnp.float32)          # (3,) scalars

    z_flat = z.reshape(ROWS, LANES).astype(jnp.float32)        # lane-dense
    ldj = ldj.astype(jnp.float32)

    z_out_flat, ldj_out = pl.pallas_call(
        _flowstep_kernel,
        out_shape=(jax.ShapeDtypeStruct((ROWS, LANES), jnp.float32),
                   jax.ShapeDtypeStruct((N,), jnp.float32)),
        in_specs=[_SMEM_SPEC,     # consts [a, b, d]
                  _SMEM_SPEC,     # ldj_in
                  _VMEM_SPEC],    # z (whole 2 KB tensor, single block)
        out_specs=(_VMEM_SPEC, _SMEM_SPEC),
    )(consts, ldj, z_flat)

    return z_out_flat.reshape(N, C, H, W), ldj_out


def init_params():
    """Deterministic synthetic parameters (shapes from FlowStep(z_channels=1))."""
    k1, k2, k3 = jax.random.split(jax.random.PRNGKey(42), 3)
    logs = 0.1 * jax.random.normal(k1, (C,), jnp.float32)
    bias = 0.1 * jax.random.normal(k2, (C,), jnp.float32)
    wmat = jnp.eye(C, dtype=jnp.float32) + 0.1 * jax.random.normal(k3, (C, C), jnp.float32)
    return {"logs": logs, "bias": bias, "w": wmat}


# ----------------------------------------------------------------------------
if __name__ == "__main__":
    params = init_params()

    kz, _ = jax.random.split(jax.random.PRNGKey(0))
    z = jax.random.normal(kz, (N, C, H, W), jnp.float32)
    ldj = jnp.zeros((N,), jnp.float32)

    # Forward pass (reverse=False), as in ContentFlow.forward default.
    z_out, ldj_out = content_flow_apply(z, ldj, params, reverse=False)
    jax.block_until_ready((z_out, ldj_out))

    # Plain-JAX reference for the same (degenerate-coupling) FlowStep.
    scale = jnp.exp(params["logs"][0])
    ref_z = (z + params["bias"][0]) * scale * params["w"][0, 0]
    ref_ldj = ldj + H * W * (params["logs"][0] +
                             jnp.log(jnp.abs(params["w"][0, 0])))
    assert jnp.allclose(z_out, ref_z, atol=1e-5, rtol=1e-5)
    assert jnp.allclose(ldj_out, ref_ldj, atol=1e-4, rtol=1e-5)

    # Reverse pass round-trip check.
    z_back, ldj_back = content_flow_apply(z_out, ldj_out, params, reverse=True)
    jax.block_until_ready((z_back, ldj_back))
    assert jnp.allclose(z_back, z, atol=1e-4, rtol=1e-4)
    assert jnp.allclose(ldj_back, ldj, atol=1e-3)

    print("KERNEL_OK")
</pallas_src>

<mosaic_0001>
module attributes {stable_mosaic.version = 11 : i64} {
  func.func @_flowstep_kernel(%arg0: memref<3xf32, #tpu.memory_space<smem>>, %arg1: memref<2xf32, #tpu.memory_space<smem>>, %arg2: memref<4x128xf32, #tpu.memory_space<vmem>>, %arg3: memref<4x128xf32, #tpu.memory_space<vmem>>, %arg4: memref<2xf32, #tpu.memory_space<smem>>) attributes {dimension_semantics = [], scalar_prefetch = 0 : i64, scratch_operands = 0 : i64, tpu.core_type = #tpu.core_type<tc>} {
    %c0 = arith.constant 0 : index
    %0 = memref.load %arg0[%c0] : memref<3xf32, #tpu.memory_space<smem>>
    %c1 = arith.constant 1 : index
    %1 = memref.load %arg0[%c1] : memref<3xf32, #tpu.memory_space<smem>>
    %c2 = arith.constant 2 : index
    %2 = memref.load %arg0[%c2] : memref<3xf32, #tpu.memory_space<smem>>
    %c0_0 = arith.constant 0 : index
    %c0_1 = arith.constant 0 : index
    %3 = vector.load %arg2[%c0_0, %c0_1] : memref<4x128xf32, #tpu.memory_space<vmem>>, vector<4x128xf32>
    %4 = vector.broadcast %0 : f32 to vector<4x128xf32>
    %5 = arith.mulf %3, %4 : vector<4x128xf32>
    %6 = vector.broadcast %1 : f32 to vector<4x128xf32>
    %7 = arith.addf %5, %6 : vector<4x128xf32>
    %c0_2 = arith.constant 0 : index
    %c0_3 = arith.constant 0 : index
    %8 = vector.load %arg3[%c0_2, %c0_3] : memref<4x128xf32, #tpu.memory_space<vmem>>, vector<4x128xf32>
    tpu.vector_store %arg3[%c0_2, %c0_3], %7 {strides = array<i32>} : memref<4x128xf32, #tpu.memory_space<vmem>>, vector<4x128xf32>,
    %c0_4 = arith.constant 0 : index
    %9 = memref.load %arg1[%c0_4] : memref<2xf32, #tpu.memory_space<smem>>
    %10 = arith.addf %9, %2 : f32
    %c0_5 = arith.constant 0 : index
    %11 = memref.load %arg4[%c0_5] : memref<2xf32, #tpu.memory_space<smem>>
    memref.store %10, %arg4[%c0_5] : memref<2xf32, #tpu.memory_space<smem>>
    %c1_6 = arith.constant 1 : index
    %12 = memref.load %arg1[%c1_6] : memref<2xf32, #tpu.memory_space<smem>>
    %13 = arith.addf %12, %2 : f32
    %c1_7 = arith.constant 1 : index
    %14 = memref.load %arg4[%c1_7] : memref<2xf32, #tpu.memory_space<smem>>
    memref.store %13, %arg4[%c1_7] : memref<2xf32, #tpu.memory_space<smem>>
    return
  }
}

</mosaic_0001>

<llo_original>
// kernel: tpu_custom_call.1
$region0: #{tpu_custom_call.1}
  #allocation0 [shape = 'u32[]', space=smem, size = 0x4, offset = 0x4, fixed_abs, tag = 'smem constant byte address 0x4 - core index']
  #allocation1 [shape = 'u32[144,128]{1,0:T(1,128)}', space=vmem, size = 0x12000, scoped, tag = 'internal scratch']
  %s0 = inlined_call_operand.hbm [shape: f32[3], index: 0, kind: input, shape index: {}]
  %s1 = inlined_call_operand.vmem [shape: f32[2], index: 1, kind: input, shape index: {}]
  %s2 = inlined_call_operand.vmem [shape: f32[4,128], index: 2, kind: input, shape index: {}]
  %s3 = inlined_call_operand.hbm [shape: f32[4,128], index: 3, kind: output, shape index: {0}]
  %s4 = inlined_call_operand.hbm [shape: f32[2], index: 4, kind: output, shape index: {1}]
  %5 = xla_tuple %s3, %s4
  %s6 = sld [smem:[#allocation0]]
  $region38: #{tpu_custom_call.1} parent=0
    _
  %s8 = ssub.s32 1, %s6
  %s9 = scalar_select 0, %s8, %s6
  $region1: #{tpu_custom_call.1} parent=0
    #allocation2 [shape = 'u8[512]{0}', space=smem, size = 0x200, scoped, tag = 'input window, operand 0, single buffered']
    #allocation3 [shape = 's32[1]{0}', space=sflag, size = 0x4, scoped, tag = 'scoped memory for tpu_custom_call.1']
    #allocation4 [shape = 's32[1]{0}', space=sflag, size = 0x4, scoped, tag = 'scoped memory for tpu_custom_call.1']
    #allocation5 [shape = 's32[1]{0}', space=sflag, size = 0x4, scoped, tag = 'scoped memory for tpu_custom_call.1']
    #allocation6 [shape = 's32[1]{0}', space=sflag, size = 0x4, scoped, tag = 'scoped memory for tpu_custom_call.1']
    #allocation7 [shape = 'u8[512]{0}', space=smem, size = 0x200, scoped, tag = 'input window, operand 1, single buffered']
    #allocation8 [shape = 'u8[2048]{0}', space=vmem, size = 0x800, scoped, tag = 'output window, operand 0, single buffered']
    #allocation9 [shape = 'u8[512]{0}', space=smem, size = 0x200, scoped, tag = 'output window, operand 1, single buffered']
    %10 = vsyncpa [#allocation4], 0
    %11 = vsyncpa [#allocation6], 0
    %12 = vsyncpa [#allocation3], 0
    %13 = vsyncpa [#allocation5], 0
    // Predicated region
    $region2: #{tpu_custom_call.1} parent=1 // pred_check
      _
    $region3: #{tpu_custom_call.1} parent=1 // pred_check_branch
      %15 = sbr.rel (0) target = $region5
    $region4: #{tpu_custom_call.1} parent=1 // pred_region
      %s17 = ssub.s32 16, 16
      %18 = vsyncadd [#allocation4], %s17
      %21 = dma.hbm_to_smem %s0, 16, [#allocation2], [#allocation4]
    $region5: #{tpu_custom_call.1} parent=1 // pred_fallthru
      _
    // Predicated region
    $region6: #{tpu_custom_call.1} parent=1 // pred_check
      _
    $region7: #{tpu_custom_call.1} parent=1 // pred_check_branch
      %23 = sbr.rel (0) target = $region9
    $region8: #{tpu_custom_call.1} parent=1 // pred_region
      %s25 = ssub.s32 16, 16
      %26 = vsyncadd [#allocation6], %s25
      %s28 = sshll.u32 %s1, 4
      %s29 = int_to_ptr.vmem [resolvable:$true] %s28
      %31 = dma.vmem_to_smem %s29, 16, [#allocation7], [#allocation6]
    $region9: #{tpu_custom_call.1} parent=1 // pred_fallthru
      _
    // Predicated region
    $region10: #{tpu_custom_call.1} parent=1 // pred_check
      _
    $region11: #{tpu_custom_call.1} parent=1 // pred_check_branch
      %33 = sbr.rel (0) target = $region13
    $region12: #{tpu_custom_call.1} parent=1 // pred_region
      _
    $region13: #{tpu_custom_call.1} parent=1 // pred_fallthru
      _
    // Predicated region
    $region14: #{tpu_custom_call.1} parent=1 // pred_check
      _
    $region15: #{tpu_custom_call.1} parent=1 // pred_check_branch
      %35 = sbr.rel (0) target = $region17
    $region16: #{tpu_custom_call.1} parent=1 // pred_region
      %36 = dma.done [#allocation4], 16
    $region17: #{tpu_custom_call.1} parent=1 // pred_fallthru
      _
    // Predicated region
    $region18: #{tpu_custom_call.1} parent=1 // pred_check
      _
    $region19: #{tpu_custom_call.1} parent=1 // pred_check_branch
      %38 = sbr.rel (0) target = $region21
    $region20: #{tpu_custom_call.1} parent=1 // pred_region
      %39 = dma.done [#allocation6], 16
    $region21: #{tpu_custom_call.1} parent=1 // pred_fallthru
      _
    %40 = sfence
    %s41 = sld [smem:[#allocation2]]
    %s42 = sld [smem:[#allocation2 + $0x1]]
    %s43 = sld [smem:[#allocation2 + $0x2]]
    %v44 = vld [vmem:[%s2] sm:$0xf]
    %v45 = vstv %s41
    %v46 = vmul.f32 %v44, %v45
    %v47 = vstv %s42
    %v48 = vadd.f32 %v46, %v47
    %49 = vst [vmem:[#allocation8] sm:$0xf] %v48
    %s50 = sld [smem:[#allocation7]]
    %s51 = sadd.f32 %s50, %s43
    %s52 = scalar_lea.smem [#allocation9], 0
    %53 = sst [smem:[%s52]] %s51
    %s54 = sld [smem:[#allocation7 + $0x1]]
    %s55 = sadd.f32 %s54, %s43
    %s56 = scalar_lea.smem [#allocation9], 1
    %57 = sst [smem:[%s56]] %s55
    // Predicated region
    $region22: #{tpu_custom_call.1} parent=1 // pred_check
      _
    $region23: #{tpu_custom_call.1} parent=1 // pred_check_branch
      %59 = sbr.rel (0) target = $region25
    $region24: #{tpu_custom_call.1} parent=1 // pred_region
      %s61 = ssub.s32 64, 64
      %62 = vsyncadd [#allocation3], %s61
      %s64 = sshll.u32 [#allocation8], 4
      %s65 = int_to_ptr.vmem [resolvable:$true] %s64
      %67 = dma.vmem_to_hbm [thread:$0]  %s65, 64, %s3, [#allocation3]
    $region25: #{tpu_custom_call.1} parent=1 // pred_fallthru
      _
    // Predicated region
    $region26: #{tpu_custom_call.1} parent=1 // pred_check
      _
    $region27: #{tpu_custom_call.1} parent=1 // pred_check_branch
      %69 = sbr.rel (0) target = $region29
    $region28: #{tpu_custom_call.1} parent=1 // pred_region
      %s71 = ssub.s32 16, 16
      %72 = vsyncadd [#allocation5], %s71
      %75 = dma.smem_to_hbm [#allocation9], 16, %s4, [#allocation5]
    $region29: #{tpu_custom_call.1} parent=1 // pred_fallthru
      _
    // Predicated region
    $region30: #{tpu_custom_call.1} parent=1 // pred_check
      _
    $region31: #{tpu_custom_call.1} parent=1 // pred_check_branch
      %77 = sbr.rel (0) target = $region33
    $region32: #{tpu_custom_call.1} parent=1 // pred_region
      %78 = dma.done [#allocation3], 64
    $region33: #{tpu_custom_call.1} parent=1 // pred_fallthru
      _
    // Predicated region
    $region34: #{tpu_custom_call.1} parent=1 // pred_check
      _
    $region35: #{tpu_custom_call.1} parent=1 // pred_check_branch
      %80 = sbr.rel (0) target = $region37
    $region36: #{tpu_custom_call.1} parent=1 // pred_region
      %81 = dma.done [#allocation5], 16
    $region37: #{tpu_custom_call.1} parent=1 // pred_fallthru
      _
    %82 = sfence
    %83 = vsyncpa [#allocation3], 1
    %84 = vsyncpa [#allocation4], 1
    %85 = vsyncpa [#allocation5], 1
    %86 = vsyncpa [#allocation6], 1

</llo_original>
